<compile_context>
chip_gen: v5e
topology: v5e:2x2
jax: 0.10.0
libtpu: 0.0.40
codegen_flags: <defaults>
</compile_context>

<pallas_src>
import jax
import jax.numpy as jnp
from jax.experimental import pallas as pl
from jax.experimental.pallas import tpu as pltpu


def _make_pos_embed_kernel(H, W):
    """col_t_ref: (F, T) transposed col_embed table (T >= W)
       row_t_ref: (F, T) transposed row_embed table (T >= H)
       out_ref:   (1, 2F, tile) block of the flat (B, 2F, H*W) output."""

    def kernel(col_t_ref, row_t_ref, out_ref):
        F = col_t_ref.shape[0]
        tile = out_ref.shape[-1]

        # Embedding lookup of arange(W)/arange(H) == leading slice of the table
        # (+ f32 cast), fused into the kernel (no separate XLA slice ops).
        col_t = col_t_ref[:, 0:W].astype(jnp.float32)   # (F, W): col_weight[w, c]
        row_t = row_t_ref[:, 0:H].astype(jnp.float32)   # (F, H): row_weight[h, c]

        # Global flattened spatial index of every output lane: l = h*W + w.
        t = pl.program_id(1)
        l = jax.lax.broadcasted_iota(jnp.int32, (1, tile), 1) + t * tile
        # h = l // W via f32 divide + floor (exact for l < 2^24 and W <= 50;
        # avoids vector integer division). Then w = l - W*h.
        h_idx = jnp.floor(l.astype(jnp.float32) / float(W)).astype(jnp.int32)
        w_idx = l - W * h_idx

        # One-hot selectors: "gather + broadcast over H/W + flatten" becomes two
        # MXU matmuls producing lane-dense (F, tile) slabs.
        sel_col = (w_idx == jax.lax.broadcasted_iota(jnp.int32, (W, 1), 0)
                   ).astype(jnp.float32)                 # (W, tile)
        sel_row = (h_idx == jax.lax.broadcasted_iota(jnp.int32, (H, 1), 0)
                   ).astype(jnp.float32)                 # (H, tile)

        hi = jax.lax.Precision.HIGHEST  # one-hot => exact f32 result
        # Channel concat on the sublane axis (offsets 0 and F): no lane masking.
        out_ref[0, 0:F, :] = jnp.dot(
            col_t, sel_col, precision=hi,
            preferred_element_type=jnp.float32).astype(out_ref.dtype)
        out_ref[0, F:2 * F, :] = jnp.dot(
            row_t, sel_row, precision=hi,
            preferred_element_type=jnp.float32).astype(out_ref.dtype)

    return kernel


def position_embedding_learned(x, row_weight, col_weight, *, out_dtype=jnp.float32):
    """Equivalent of PositionEmbeddingLearned.forward.

    x:          (B, C, H, W)  -- only the shape is used
    row_weight: (50, F)       nn.Embedding(50, F).weight
    col_weight: (50, F)
    returns:    (B, 2F, H, W) in out_dtype (f32 default, matching PyTorch)
    """
    B = int(x.shape[0])
    H, W = int(x.shape[-2]), int(x.shape[-1])
    F = int(row_weight.shape[1])
    HW = H * W
    assert H <= row_weight.shape[0] and W <= col_weight.shape[0], \
        "spatial size exceeds 50-entry embedding tables (same limit as PyTorch)"

    # Channels-first table layout (F, 50): one tiny (<=51 KB) parameter
    # transpose+cast; everything downstream stays lane-dense.
    col_t = jnp.asarray(col_weight, jnp.float32).T   # (F, 50)
    row_t = jnp.asarray(row_weight, jnp.float32).T   # (F, 50)
    tbl = col_t.shape[1]

    out_bytes = jnp.dtype(out_dtype).itemsize
    # Spatial tiling: single block for small maps (no per-step overhead);
    # 128-aligned tiles for big ones so a double-buffered block stays a few MiB.
    if 2 * F * HW * out_bytes <= (4 << 20):
        tile = HW
    else:
        tile = 2048
    n_t = pl.cdiv(HW, tile)

    cost = pl.CostEstimate(
        flops=2 * B * n_t * tile * F * (H + W),
        transcendentals=0,
        bytes_accessed=B * 2 * F * HW * out_bytes + 2 * F * tbl * 4,
    )

    out_flat = pl.pallas_call(
        _make_pos_embed_kernel(H, W),
        out_shape=jax.ShapeDtypeStruct((B, 2 * F, HW), out_dtype),
        grid=(B, n_t),
        in_specs=[
            pl.BlockSpec((F, tbl), lambda b, t: (0, 0)),   # col_t (same block -> fetched once)
            pl.BlockSpec((F, tbl), lambda b, t: (0, 0)),   # row_t
        ],
        out_specs=pl.BlockSpec((1, 2 * F, tile), lambda b, t: (b, 0, t)),
        compiler_params=pltpu.CompilerParams(
            dimension_semantics=("parallel", "parallel")),
        cost_estimate=cost,
    )(col_t, row_t)

    # Layout-preserving (free) reshape back to NCHW.
    return out_flat.reshape(B, 2 * F, H, W)


if __name__ == "__main__":
    key = jax.random.PRNGKey(0)
    k_x, k_row, k_col = jax.random.split(key, 3)

    B, C, H, W = 2, 4, 16, 16
    num_pos_feats = 32  # small, consistent with the module (default 256)

    # Deterministic "parameters": nn.init.uniform_ -> U[0, 1)
    row_weight = jax.random.uniform(k_row, (50, num_pos_feats), dtype=jnp.float32)
    col_weight = jax.random.uniform(k_col, (50, num_pos_feats), dtype=jnp.float32)

    x = jax.random.normal(k_x, (B, C, H, W), dtype=jnp.float32)

    pos = position_embedding_learned(x, row_weight, col_weight)
    pos = jax.block_until_ready(pos)

    # Reference check in plain JAX (mirrors the PyTorch forward exactly).
    x_emb = col_weight[:W]                               # (W, F)
    y_emb = row_weight[:H]                               # (H, F)
    ref = jnp.concatenate(
        [jnp.broadcast_to(x_emb[None, :, :], (H, W, num_pos_feats)),
         jnp.broadcast_to(y_emb[:, None, :], (H, W, num_pos_feats))],
        axis=-1)
    ref = jnp.broadcast_to(jnp.transpose(ref, (2, 0, 1))[None],
                           (B, 2 * num_pos_feats, H, W))

    assert pos.shape == (B, 2 * num_pos_feats, H, W)
    assert pos.dtype == jnp.float32
    assert jnp.allclose(pos, ref, rtol=1e-6, atol=1e-6), "mismatch vs reference"

    print("KERNEL_OK")
</pallas_src>

<mosaic_0001>
module attributes {stable_mosaic.version = 11 : i64} {
  func.func @kernel(%arg0: i32, %arg1: i32, %arg2: memref<32x50xf32, #tpu.memory_space<vmem>>, %arg3: memref<32x50xf32, #tpu.memory_space<vmem>>, %arg4: memref<1x64x256xf32, #tpu.memory_space<vmem>>) attributes {dimension_semantics = [#tpu.dimension_semantics<parallel>, #tpu.dimension_semantics<parallel>], iteration_bounds = array<i64: 2, 1>, scalar_prefetch = 0 : i64, scratch_operands = 0 : i64, tpu.core_type = #tpu.core_type<tc>, window_params = [{pipeline_mode = #tpu.pipeline_mode<synchronous>, transform_indices = @transform_0, window_bounds = array<i64: 32, 50>}, {pipeline_mode = #tpu.pipeline_mode<synchronous>, transform_indices = @transform_1, window_bounds = array<i64: 32, 50>}, {transform_indices = @transform_2, window_bounds = array<i64: 1, 64, 256>}]} {
    %c0 = arith.constant 0 : index
    %c0_0 = arith.constant 0 : index
    %0 = vector.load %arg2[%c0, %c0_0] : memref<32x50xf32, #tpu.memory_space<vmem>>, vector<32x16xf32>
    %c0_1 = arith.constant 0 : index
    %c0_2 = arith.constant 0 : index
    %1 = vector.load %arg3[%c0_1, %c0_2] : memref<32x50xf32, #tpu.memory_space<vmem>>, vector<32x16xf32>
    %2 = tpu.iota {dimensions = array<i32: 1>} : vector<1x256xi32>
    %c256_i32 = arith.constant 256 : i32
    %3 = arith.muli %arg1, %c256_i32 : i32
    %4 = vector.broadcast %3 : i32 to vector<1x256xi32>
    %5 = arith.addi %2, %4 : vector<1x256xi32>
    %6 = arith.sitofp %5 : vector<1x256xi32> to vector<1x256xf32>
    %cst = arith.constant 1.600000e+01 : f32
    %7 = vector.broadcast %cst : f32 to vector<1x256xf32>
    %8 = arith.divf %6, %7 : vector<1x256xf32>
    %9 = math.floor %8 : vector<1x256xf32>
    %10 = arith.fptosi %9 : vector<1x256xf32> to vector<1x256xi32>
    %c16_i32 = arith.constant 16 : i32
    %11 = vector.broadcast %c16_i32 : i32 to vector<1x256xi32>
    %12 = arith.muli %11, %10 : vector<1x256xi32>
    %13 = arith.subi %5, %12 : vector<1x256xi32>
    %14 = tpu.iota {dimensions = array<i32: 0>} : vector<16x1xi32>
    %15 = vector.broadcast %13 : vector<1x256xi32> to vector<16x256xi32>
    %16 = vector.broadcast %14 : vector<16x1xi32> to vector<16x256xi32>
    %17 = arith.cmpi eq, %15, %16 : vector<16x256xi32>
    %18 = arith.extui %17 : vector<16x256xi1> to vector<16x256xi32>
    %19 = arith.sitofp %18 : vector<16x256xi32> to vector<16x256xf32>
    %20 = tpu.iota {dimensions = array<i32: 0>} : vector<16x1xi32>
    %21 = vector.broadcast %10 : vector<1x256xi32> to vector<16x256xi32>
    %22 = vector.broadcast %20 : vector<16x1xi32> to vector<16x256xi32>
    %23 = arith.cmpi eq, %21, %22 : vector<16x256xi32>
    %24 = arith.extui %23 : vector<16x256xi1> to vector<16x256xi32>
    %25 = arith.sitofp %24 : vector<16x256xi32> to vector<16x256xf32>
    %cst_3 = arith.constant dense<0.000000e+00> : vector<32x256xf32>
    %26 = tpu.matmul %0, %19, %cst_3 {dimension_numbers = #tpu.dot_dimension_numbers<[1], [0], [0], [1], [0, 0, 1, 1], [], []>, precision = #tpu.contract_precision<fp32>} : vector<32x16xf32>, vector<16x256xf32>, vector<32x256xf32> -> vector<32x256xf32>
    %c0_4 = arith.constant 0 : index
    %c0_5 = arith.constant 0 : index
    %c0_6 = arith.constant 0 : index
    %27 = vector.load %arg4[%c0_4, %c0_5, %c0_6] : memref<1x64x256xf32, #tpu.memory_space<vmem>>, vector<1x32x256xf32>
    %28 = vector.shape_cast %27 : vector<1x32x256xf32> to vector<32x256xf32>
    %29 = vector.shape_cast %26 : vector<32x256xf32> to vector<1x32x256xf32>
    tpu.vector_store %arg4[%c0_4, %c0_5, %c0_6], %29 {strides = array<i32>} : memref<1x64x256xf32, #tpu.memory_space<vmem>>, vector<1x32x256xf32>,
    %cst_7 = arith.constant dense<0.000000e+00> : vector<32x256xf32>
    %30 = tpu.matmul %1, %25, %cst_7 {dimension_numbers = #tpu.dot_dimension_numbers<[1], [0], [0], [1], [0, 0, 1, 1], [], []>, precision = #tpu.contract_precision<fp32>} : vector<32x16xf32>, vector<16x256xf32>, vector<32x256xf32> -> vector<32x256xf32>
    %c0_8 = arith.constant 0 : index
    %c32 = arith.constant 32 : index
    %c0_9 = arith.constant 0 : index
    %31 = vector.load %arg4[%c0_8, %c32, %c0_9] : memref<1x64x256xf32, #tpu.memory_space<vmem>>, vector<1x32x256xf32>
    %32 = vector.shape_cast %31 : vector<1x32x256xf32> to vector<32x256xf32>
    %33 = vector.shape_cast %30 : vector<32x256xf32> to vector<1x32x256xf32>
    tpu.vector_store %arg4[%c0_8, %c32, %c0_9], %33 {strides = array<i32>} : memref<1x64x256xf32, #tpu.memory_space<vmem>>, vector<1x32x256xf32>,
    return
  }
  func.func @transform_0(%arg0: i32, %arg1: i32) -> (i32, i32) {
    %c0_i32 = arith.constant 0 : i32
    %c0_i32_0 = arith.constant 0 : i32
    %c0_i32_1 = arith.constant 0 : i32
    return %c0_i32, %c0_i32_0 : i32, i32
  }
  func.func @transform_1(%arg0: i32, %arg1: i32) -> (i32, i32) {
    %c0_i32 = arith.constant 0 : i32
    %c0_i32_0 = arith.constant 0 : i32
    %c0_i32_1 = arith.constant 0 : i32
    return %c0_i32, %c0_i32_0 : i32, i32
  }
  func.func @transform_2(%arg0: i32, %arg1: i32) -> (i32, i32, i32) {
    %c0_i32 = arith.constant 0 : i32
    %c0_i32_0 = arith.constant 0 : i32
    return %arg0, %c0_i32, %arg1 : i32, i32, i32
  }
}

</mosaic_0001>

<llo_original>
// kernel: tpu_custom_call.1
$region0: #{tpu_custom_call.1}
  #allocation0 [shape = 'u32[]', space=smem, size = 0x4, offset = 0x4, fixed_abs, tag = 'smem constant byte address 0x4 - core index']
  #allocation1 [shape = 'u32[72,128]{1,0:T(1,128)}', space=vmem, size = 0x9000, scoped, tag = 'internal scratch']
  %s0 = inlined_call_operand.hbm [shape: f32[32,50], index: 0, kind: input, shape index: {}]
  %s1 = inlined_call_operand.hbm [shape: f32[32,50], index: 1, kind: input, shape index: {}]
  %s2 = inlined_call_operand.hbm [shape: f32[2,64,256], index: 2, kind: output, shape index: {}]
  %s3 = sld [smem:[#allocation0]]
  $region49: #{tpu_custom_call.1} parent=0
    _
  %s5 = ssub.s32 1, %s3
  %s6 = scalar_select 0, %s5, %s3
  $region1: #{tpu_custom_call.1} parent=0
    #allocation2 [shape = 'u8[16384]{0}', space=vmem, size = 0x4000, scoped, tag = 'input window, operand 0, single buffered']
    #allocation3 [shape = 's32[2]{0}', space=sflag, size = 0x8, scoped, tag = 'scoped memory for tpu_custom_call.1']
    #allocation4 [shape = 's32[2]{0}', space=sflag, size = 0x8, scoped, tag = 'scoped memory for tpu_custom_call.1']
    #allocation5 [shape = 'u8[16384]{0}', space=vmem, size = 0x4000, scoped, tag = 'input window, operand 1, single buffered']
    #allocation6 [shape = 's32[1]{0}', space=sflag, size = 0x4, scoped, tag = 'scoped memory for tpu_custom_call.1']
    #allocation7 [shape = 'u8[131072]{0}', space=vmem, size = 0x20000, scoped, tag = 'output window, operand 0']
    %7 = vsyncpa [#allocation3], 0
    %8 = vsyncpa [#allocation6], 0
    %9 = vsyncpa [#allocation4], 0
    %s10 = scalar_lea.sflag [#allocation4], 1
    %11 = vsyncpa %s10, 0
    loop: start=0, step=1, limit=4
    $region2: #{tpu_custom_call.1} parent=1 // loop_pre_header
      _
    $region3: #{tpu_custom_call.1} parent=1 // loop_header
      %s13 = sphi 0, %s17
      %p14 = scmp.ge.s32.totalorder %s13, 4
      %s20 = sphi 0, %s32
      %s21 = sphi 0, %s28
      %s22 = sphi 0, %s20
      %s23 = sphi 0, %s21
      %s24 = sphi 0, %s22
      %s25 = sphi 0, %s23
      %s33 = sphi 0, %s33
      %s35 = sphi 0, %s33
      %s36 = sphi 0, %s35
      %s50 = sphi 0, %s36
      %s54 = sphi 0, %s54
      %s56 = sphi 0, %s54
      %s57 = sphi 0, %s56
      %s71 = sphi 0, %s57
      %s79 = sphi 0, %s81
      %s82 = sphi 0, %s79
      %s83 = sphi 0, %s82
      %s99 = sphi 0, %s83
    $region4: #{tpu_custom_call.1} parent=1 // loop_header_branch
      %16 = sbr.rel (%p14) target = $region8
    $region5: #{tpu_custom_call.1} parent=1 // loop_body
      %s18 = ssub.s32 %s13, 1
      %s19 = ssub.s32 %s13, 2
      %s26 = sadd.s32 1, %s21
      %p27 = scmp.ge.s32.totalorder %s26, 1
      %s28 = scalar_select %p27, 0, %s26
      %s29 = sadd.s32 1, %s20
      %s30 = scalar_select %p27, %s29, %s20
      %p31 = scmp.ge.s32.totalorder %s30, 2
      %s32 = scalar_select %p31, 0, %s30
      %s34 = sadd.s32 %s33, 1
      %p37 = scmp.eq.s32.totalorder %s13, 1
      %p38 = scmp.ne.s32.totalorder %s33, %s35
      %p39 = scmp.eq.s32.totalorder %s13, 0
      %p40 = por %p38, %p39
      %p41 = scmp.ne.s32.totalorder %s33, %s35
      %p42 = scmp.eq.s32.totalorder %s18, 1
      %p43 = por %p41, %p42
      %p44 = scmp.ne.s32.totalorder %s35, %s36
      %p45 = scmp.eq.s32.totalorder %s18, 0
      %p46 = por %p44, %p45
      %p47 = scmp.ne.s32.totalorder %s35, %s36
      %p48 = scmp.eq.s32.totalorder %s19, 1
      %p49 = por %p47, %p48
      %p51 = scmp.ne.s32.totalorder %s36, %s50
      %p52 = scmp.eq.s32.totalorder %s19, 0
      %p53 = por %p51, %p52
      %s55 = sadd.s32 %s54, 1
      %p58 = scmp.eq.s32.totalorder %s13, 1
      %p59 = scmp.ne.s32.totalorder %s54, %s56
      %p60 = scmp.eq.s32.totalorder %s13, 0
      %p61 = por %p59, %p60
      %p62 = scmp.ne.s32.totalorder %s54, %s56
      %p63 = scmp.eq.s32.totalorder %s18, 1
      %p64 = por %p62, %p63
      %p65 = scmp.ne.s32.totalorder %s56, %s57
      %p66 = scmp.eq.s32.totalorder %s18, 0
      %p67 = por %p65, %p66
      %p68 = scmp.ne.s32.totalorder %s56, %s57
      %p69 = scmp.eq.s32.totalorder %s19, 1
      %p70 = por %p68, %p69
      %p72 = scmp.ne.s32.totalorder %s57, %s71
      %p73 = scmp.eq.s32.totalorder %s19, 0
      %p74 = por %p72, %p73
      %s75 = ssub.s32 %s20, %s32
      %s76 = ssub.s32 %s21, %s28
      %s77 = sor.u32 %s75, %s76
      %p78 = scmp.eq.s32.totalorder %s77, 0
      %s80 = sadd.s32 %s79, 1
      %s81 = scalar_select %p78, %s79, %s80
      %p84 = pneg %p78
      %p85 = scmp.eq.s32.totalorder %s13, 1
      %p86 = por %p84, %p85
      %p87 = scmp.ne.s32.totalorder %s79, %s82
      %p88 = scmp.eq.s32.totalorder %s13, 0
      %p89 = por %p87, %p88
      %p90 = scmp.ne.s32.totalorder %s79, %s82
      %p91 = scmp.eq.s32.totalorder %s18, 1
      %p92 = por %p90, %p91
      %p93 = scmp.ne.s32.totalorder %s82, %s83
      %p94 = scmp.eq.s32.totalorder %s18, 0
      %p95 = por %p93, %p94
      %p96 = scmp.ne.s32.totalorder %s82, %s83
      %p97 = scmp.eq.s32.totalorder %s19, 1
      %p98 = por %p96, %p97
      %p100 = scmp.ne.s32.totalorder %s83, %s99
      %p101 = scmp.eq.s32.totalorder %s19, 0
      %p102 = por %p100, %p101
      %p103 = scmp.le.s32.totalorder 1, %s13
      %p104 = scmp.lt.s32.totalorder %s13, 3
      %p105 = pnand %p103, %p104
      %p106 = pneg %p105
      // Predicated region
      $region9: #{tpu_custom_call.1} parent=5 // pred_check
        _
      $region10: #{tpu_custom_call.1} parent=5 // pred_check_branch
        %108 = sbr.rel (%p105) target = $region12
      $region11: #{tpu_custom_call.1} parent=5 // pred_region
        %s109 = ssub.s32 %s13, 1
        // Predicated region
        $region13: #{tpu_custom_call.1} parent=11 // pred_check
          %p110 = pneg %p46
        $region14: #{tpu_custom_call.1} parent=11 // pred_check_branch
          %112 = sbr.rel (%p110) target = $region16
        $region15: #{tpu_custom_call.1} parent=11 // pred_region
          %114 = vsyncadd [#allocation3], 0
          %s115 = sshll.u32 %s0, 4
          %s116 = int_to_ptr.hbm [resolvable:$true] %s115
          %s117 = sshll.u32 [#allocation2], 4
          %s118 = int_to_ptr.vmem [resolvable:$true] %s117
          %123 = dma.hbm_to_vmem [thread:$0]  %s116, 512, %s118, [#allocation3], 128, 128, 8
        $region16: #{tpu_custom_call.1} parent=11 // pred_fallthru
          _
        // Predicated region
        $region17: #{tpu_custom_call.1} parent=11 // pred_check
          %p124 = pneg %p67
        $region18: #{tpu_custom_call.1} parent=11 // pred_check_branch
          %126 = sbr.rel (%p124) target = $region20
        $region19: #{tpu_custom_call.1} parent=11 // pred_region
          %128 = vsyncadd [#allocation6], 0
          %s129 = sshll.u32 %s1, 4
          %s130 = int_to_ptr.hbm [resolvable:$true] %s129
          %s131 = sshll.u32 [#allocation5], 4
          %s132 = int_to_ptr.vmem [resolvable:$true] %s131
          %137 = dma.hbm_to_vmem [thread:$0]  %s130, 512, %s132, [#allocation6], 128, 128, 8
        $region20: #{tpu_custom_call.1} parent=11 // pred_fallthru
          _
      $region12: #{tpu_custom_call.1} parent=5 // pred_fallthru
        _
      %p138 = scmp.lt.s32.totalorder %s13, 2
      // Predicated region
      $region21: #{tpu_custom_call.1} parent=5 // pred_check
        %p139 = pneg %p138
      $region22: #{tpu_custom_call.1} parent=5 // pred_check_branch
        %141 = sbr.rel (%p139) target = $region24
      $region23: #{tpu_custom_call.1} parent=5 // pred_region
        _
      $region24: #{tpu_custom_call.1} parent=5 // pred_fallthru
        _
      %p142 = scmp.le.s32.totalorder 1, %s13
      %p143 = scmp.lt.s32.totalorder %s13, 3
      %p144 = pnand %p142, %p143
      %p145 = pneg %p144
      // Predicated region
      $region25: #{tpu_custom_call.1} parent=5 // pred_check
        _
      $region26: #{tpu_custom_call.1} parent=5 // pred_check_branch
        %147 = sbr.rel (%p144) target = $region28
      $region27: #{tpu_custom_call.1} parent=5 // pred_region
        %s148 = ssub.s32 %s13, 1
        // Predicated region
        $region29: #{tpu_custom_call.1} parent=27 // pred_check
          %p149 = pneg %p46
        $region30: #{tpu_custom_call.1} parent=27 // pred_check_branch
          %151 = sbr.rel (%p149) target = $region32
        $region31: #{tpu_custom_call.1} parent=27 // pred_region
          %153 = dma.done [#allocation3], 512
        $region32: #{tpu_custom_call.1} parent=27 // pred_fallthru
          _
        // Predicated region
        $region33: #{tpu_custom_call.1} parent=27 // pred_check
          %p154 = pneg %p67
        $region34: #{tpu_custom_call.1} parent=27 // pred_check_branch
          %156 = sbr.rel (%p154) target = $region36
        $region35: #{tpu_custom_call.1} parent=27 // pred_region
          %158 = dma.done [#allocation6], 512
        $region36: #{tpu_custom_call.1} parent=27 // pred_fallthru
          _
        %p159 = pneg %p46
        %p160 = pneg %p43
        %p161 = pneg %p67
        %p162 = pneg %p64
        %p163 = pneg %p95
        %p164 = pneg %p92
        %s165 = sand.u32 %s82, 1
        %s166 = scalar_lea.sflag [#allocation4], %s165
        %s167 = sand.u32 %s82, 1
        %s168 = smul.addr %s167, 128
        %s169 = scalar_lea.vmem [#allocation7], %s168
        %s170 = smul.u32 2, %s23
        %v171 = vld [vmem:[#allocation2] sm:$0xff]
        %v172 = vld [vmem:[#allocation2 + $0x8] sm:$0xff]
        %v173 = vld [vmem:[#allocation2 + $0x10] sm:$0xff]
        %v174 = vld [vmem:[#allocation2 + $0x18] sm:$0xff]
        %v175 = vld [vmem:[#allocation5] sm:$0xff]
        %v176 = vld [vmem:[#allocation5 + $0x8] sm:$0xff]
        %v177 = vld [vmem:[#allocation5 + $0x10] sm:$0xff]
        %v178 = vld [vmem:[#allocation5 + $0x18] sm:$0xff]
        %v179 = vlaneseq
        %v180 = vand.u32 %v179, 127
        %v181 = vadd.s32 %v180, 128
        %s182 = smul.u32 %s23, 256
        %v183 = vstv %s182
        %v184 = vadd.s32 %v180, %v183
        %v185 = vadd.s32 %v181, %v183
        %v186 = vcvt.s32.f32 %v184
        %v187 = vcvt.s32.f32 %v185
        %v188 = vrcp.pop 16.0
        %v189 = vmul.f32 16.0, %v188
        %v190 = vsub.f32 1.0, %v189
        %v191 = vmul.f32 %v188, %v190
        %v192 = vadd.f32 %v188, %v191
        %vm193 = vweird.f32 %v188
        %v194 = vsel %vm193, %v188, %v192
        %v195 = vmul.f32 %v186, %v194
        %v196 = vmul.f32 %v187, %v194
        %v197 = vfloor.f32 %v195
        %v198 = vfloor.f32 %v196
        %v199 = vcvt.f32.s32.to.zero.pseudo %v197
        %v200 = vcvt.f32.s32.to.zero.pseudo %v198
        %v201 = vmul.u32 %v199, 16
        %v202 = vmul.u32 %v200, 16
        %v203 = vsub.s32 %v184, %v201
        %v204 = vsub.s32 %v185, %v202
        %v205 = vlaneseq
        %v206 = vshrl.u32 %v205, 7
        %v207 = vadd.s32 %v206, 8
        %vm208 = vcmp.eq.s32.totalorder %v203, %v206
        %vm209 = vcmp.eq.s32.totalorder %v204, %v206
        %vm210 = vcmp.eq.s32.totalorder %v203, %v207
        %vm211 = vcmp.eq.s32.totalorder %v204, %v207
        %v212 = vsel %vm208, 1, 0
        %v213 = vsel %vm209, 1, 0
        %v214 = vsel %vm210, 1, 0
        %v215 = vsel %vm211, 1, 0
        %v216 = vcvt.s32.f32 %v212
        %v217 = vcvt.s32.f32 %v213
        %v218 = vcvt.s32.f32 %v214
        %v219 = vcvt.s32.f32 %v215
        %vm220 = vcmp.eq.s32.totalorder %v199, %v206
        %vm221 = vcmp.eq.s32.totalorder %v200, %v206
        %vm222 = vcmp.eq.s32.totalorder %v199, %v207
        %vm223 = vcmp.eq.s32.totalorder %v200, %v207
        %v224 = vsel %vm220, 1, 0
        %v225 = vsel %vm221, 1, 0
        %v226 = vsel %vm222, 1, 0
        %v227 = vsel %vm223, 1, 0
        %v228 = vcvt.s32.f32 %v224
        %v229 = vcvt.s32.f32 %v225
        %v230 = vcvt.s32.f32 %v226
        %v231 = vcvt.s32.f32 %v227
        %vm232 = vcmask 130048
        %v234 = vsel %vm232, %v171, 0
        %v237 = vsel %vm232, %v172, 0
        %v240 = vsel %vm232, %v173, 0
        %v243 = vsel %vm232, %v174, 0
        %245 = vmatpush.msra.mxu0 0.0
        %246 = vmatpush.msra.mxu0 0.0
        %247 = vmatpush.msra.mxu0 0.0
        %248 = vmatpush.msra.mxu0 0.0
        %249 = vmatpush.msra.mxu0 0.0
        %250 = vmatpush.msra.mxu0 0.0
        %251 = vmatpush.msra.mxu0 0.0
        %252 = vmatpush.msra.mxu0 0.0
        %253 = vmatpush.msra.mxu0 0.0
        %254 = vmatpush.msra.mxu0 0.0
        %255 = vmatpush.msra.mxu0 0.0
        %256 = vmatpush.msra.mxu0 0.0
        %257 = vmatpush.msra.mxu0 0.0
        %258 = vmatpush.msra.mxu0 0.0
        %v259 = vand.u32 %v218, 4294901760
        %260 = vmatpush.msra.mxu0 %v259
        %v261 = vand.u32 %v216, 4294901760
        %262 = vmatpush.msra.mxu0 %v261
        %v263 = vand.u32 %v234, 4294901760
        %v264 = vsub.f32 %v234, %v263
        %v265 = vand.u32 %v264, 4294901760
        %v266 = vsub.f32 %v264, %v265
        %v267 = vand.u32 %v266, 4294901760
        %268 = vmatmul.f32.gmra.mxu0 %v267
        %v269 = vpop.f32.mrf.mxu0
        %v270 = vadd.f32 0.0, %v269
        %v271 = vand.u32 %v237, 4294901760
        %v272 = vsub.f32 %v237, %v271
        %v273 = vand.u32 %v272, 4294901760
        %v274 = vsub.f32 %v272, %v273
        %v275 = vand.u32 %v274, 4294901760
        %276 = vmatmul.f32.gmra.mxu0 %v275
        %v277 = vpop.f32.mrf.mxu0
        %v278 = vadd.f32 0.0, %v277
        %v279 = vand.u32 %v240, 4294901760
        %v280 = vsub.f32 %v240, %v279
        %v281 = vand.u32 %v280, 4294901760
        %v282 = vsub.f32 %v280, %v281
        %v283 = vand.u32 %v282, 4294901760
        %284 = vmatmul.f32.gmra.mxu0 %v283
        %v285 = vpop.f32.mrf.mxu0
        %v286 = vadd.f32 0.0, %v285
        %v287 = vand.u32 %v243, 4294901760
        %v288 = vsub.f32 %v243, %v287
        %v289 = vand.u32 %v288, 4294901760
        %v290 = vsub.f32 %v288, %v289
        %v291 = vand.u32 %v290, 4294901760
        %292 = vmatmul.f32.gmra.mxu0 %v291
        %v293 = vpop.f32.mrf.mxu0
        %v294 = vadd.f32 0.0, %v293
        %295 = vdwg.mxu0
        %296 = vmatpush.msra.mxu0 0.0
        %297 = vmatpush.msra.mxu0 0.0
        %298 = vmatpush.msra.mxu0 0.0
        %299 = vmatpush.msra.mxu0 0.0
        %300 = vmatpush.msra.mxu0 0.0
        %301 = vmatpush.msra.mxu0 0.0
        %302 = vmatpush.msra.mxu0 0.0
        %303 = vmatpush.msra.mxu0 0.0
        %304 = vmatpush.msra.mxu0 0.0
        %305 = vmatpush.msra.mxu0 0.0
        %306 = vmatpush.msra.mxu0 0.0
        %307 = vmatpush.msra.mxu0 0.0
        %308 = vmatpush.msra.mxu0 0.0
        %309 = vmatpush.msra.mxu0 0.0
        %v310 = vand.u32 %v218, 4294901760
        %v311 = vsub.f32 %v218, %v310
        %v312 = vand.u32 %v311, 4294901760
        %v313 = vsub.f32 %v311, %v312
        %v314 = vand.u32 %v313, 4294901760
        %315 = vmatpush.msra.mxu0 %v314
        %v316 = vand.u32 %v216, 4294901760
        %v317 = vsub.f32 %v216, %v316
        %v318 = vand.u32 %v317, 4294901760
        %v319 = vsub.f32 %v317, %v318
        %v320 = vand.u32 %v319, 4294901760
        %321 = vmatpush.msra.mxu0 %v320
        %v322 = vand.u32 %v234, 4294901760
        %323 = vmatmul.f32.gmra.mxu0 %v322
        %v324 = vpop.f32.mrf.mxu0
        %v325 = vadd.f32 %v270, %v324
        %v326 = vand.u32 %v237, 4294901760
        %327 = vmatmul.f32.gmra.mxu0 %v326
        %v328 = vpop.f32.mrf.mxu0
        %v329 = vadd.f32 %v278, %v328
        %v330 = vand.u32 %v240, 4294901760
        %331 = vmatmul.f32.gmra.mxu0 %v330
        %v332 = vpop.f32.mrf.mxu0
        %v333 = vadd.f32 %v286, %v332
        %v334 = vand.u32 %v243, 4294901760
        %335 = vmatmul.f32.gmra.mxu0 %v334
        %v336 = vpop.f32.mrf.mxu0
        %v337 = vadd.f32 %v294, %v336
        %338 = vdwg.mxu0
        %339 = vmatpush.msra.mxu0 0.0
        %340 = vmatpush.msra.mxu0 0.0
        %341 = vmatpush.msra.mxu0 0.0
        %342 = vmatpush.msra.mxu0 0.0
        %343 = vmatpush.msra.mxu0 0.0
        %344 = vmatpush.msra.mxu0 0.0
        %345 = vmatpush.msra.mxu0 0.0
        %346 = vmatpush.msra.mxu0 0.0
        %347 = vmatpush.msra.mxu0 0.0
        %348 = vmatpush.msra.mxu0 0.0
        %349 = vmatpush.msra.mxu0 0.0
        %350 = vmatpush.msra.mxu0 0.0
        %351 = vmatpush.msra.mxu0 0.0
        %352 = vmatpush.msra.mxu0 0.0
        %v353 = vand.u32 %v218, 4294901760
        %v354 = vsub.f32 %v218, %v353
        %355 = vmatpush.msra.mxu0 %v354
        %v356 = vand.u32 %v216, 4294901760
        %v357 = vsub.f32 %v216, %v356
        %358 = vmatpush.msra.mxu0 %v357
        %v359 = vand.u32 %v234, 4294901760
        %v360 = vsub.f32 %v234, %v359
        %361 = vmatmul.f32.gmra.mxu0 %v360
        %v362 = vpop.f32.mrf.mxu0
        %v363 = vadd.f32 %v325, %v362
        %v364 = vand.u32 %v237, 4294901760
        %v365 = vsub.f32 %v237, %v364
        %366 = vmatmul.f32.gmra.mxu0 %v365
        %v367 = vpop.f32.mrf.mxu0
        %v368 = vadd.f32 %v329, %v367
        %v369 = vand.u32 %v240, 4294901760
        %v370 = vsub.f32 %v240, %v369
        %371 = vmatmul.f32.gmra.mxu0 %v370
        %v372 = vpop.f32.mrf.mxu0
        %v373 = vadd.f32 %v333, %v372
        %v374 = vand.u32 %v243, 4294901760
        %v375 = vsub.f32 %v243, %v374
        %376 = vmatmul.f32.gmra.mxu0 %v375
        %v377 = vpop.f32.mrf.mxu0
        %v378 = vadd.f32 %v337, %v377
        %379 = vdwg.mxu0
        %380 = vmatpush.msra.mxu0 0.0
        %381 = vmatpush.msra.mxu0 0.0
        %382 = vmatpush.msra.mxu0 0.0
        %383 = vmatpush.msra.mxu0 0.0
        %384 = vmatpush.msra.mxu0 0.0
        %385 = vmatpush.msra.mxu0 0.0
        %386 = vmatpush.msra.mxu0 0.0
        %387 = vmatpush.msra.mxu0 0.0
        %388 = vmatpush.msra.mxu0 0.0
        %389 = vmatpush.msra.mxu0 0.0
        %390 = vmatpush.msra.mxu0 0.0
        %391 = vmatpush.msra.mxu0 0.0
        %392 = vmatpush.msra.mxu0 0.0
        %393 = vmatpush.msra.mxu0 0.0
        %v394 = vand.u32 %v218, 4294901760
        %395 = vmatpush.msra.mxu0 %v394
        %v396 = vand.u32 %v216, 4294901760
        %397 = vmatpush.msra.mxu0 %v396
        %v398 = vand.u32 %v234, 4294901760
        %v399 = vsub.f32 %v234, %v398
        %v400 = vand.u32 %v399, 4294901760
        %401 = vmatmul.f32.gmra.mxu0 %v400
        %v402 = vpop.f32.mrf.mxu0
        %v403 = vadd.f32 %v363, %v402
        %v404 = vand.u32 %v237, 4294901760
        %v405 = vsub.f32 %v237, %v404
        %v406 = vand.u32 %v405, 4294901760
        %407 = vmatmul.f32.gmra.mxu0 %v406
        %v408 = vpop.f32.mrf.mxu0
        %v409 = vadd.f32 %v368, %v408
        %v410 = vand.u32 %v240, 4294901760
        %v411 = vsub.f32 %v240, %v410
        %v412 = vand.u32 %v411, 4294901760
        %413 = vmatmul.f32.gmra.mxu0 %v412
        %v414 = vpop.f32.mrf.mxu0
        %v415 = vadd.f32 %v373, %v414
        %v416 = vand.u32 %v243, 4294901760
        %v417 = vsub.f32 %v243, %v416
        %v418 = vand.u32 %v417, 4294901760
        %419 = vmatmul.f32.gmra.mxu0 %v418
        %v420 = vpop.f32.mrf.mxu0
        %v421 = vadd.f32 %v378, %v420
        %422 = vdwg.mxu0
        %423 = vmatpush.msra.mxu0 0.0
        %424 = vmatpush.msra.mxu0 0.0
        %425 = vmatpush.msra.mxu0 0.0
        %426 = vmatpush.msra.mxu0 0.0
        %427 = vmatpush.msra.mxu0 0.0
        %428 = vmatpush.msra.mxu0 0.0
        %429 = vmatpush.msra.mxu0 0.0
        %430 = vmatpush.msra.mxu0 0.0
        %431 = vmatpush.msra.mxu0 0.0
        %432 = vmatpush.msra.mxu0 0.0
        %433 = vmatpush.msra.mxu0 0.0
        %434 = vmatpush.msra.mxu0 0.0
        %435 = vmatpush.msra.mxu0 0.0
        %436 = vmatpush.msra.mxu0 0.0
        %v437 = vand.u32 %v218, 4294901760
        %v438 = vsub.f32 %v218, %v437
        %v439 = vand.u32 %v438, 4294901760
        %440 = vmatpush.msra.mxu0 %v439
        %v441 = vand.u32 %v216, 4294901760
        %v442 = vsub.f32 %v216, %v441
        %v443 = vand.u32 %v442, 4294901760
        %444 = vmatpush.msra.mxu0 %v443
        %v445 = vand.u32 %v234, 4294901760
        %446 = vmatmul.f32.gmra.mxu0 %v445
        %v447 = vpop.f32.mrf.mxu0
        %v448 = vadd.f32 %v403, %v447
        %v449 = vand.u32 %v237, 4294901760
        %450 = vmatmul.f32.gmra.mxu0 %v449
        %v451 = vpop.f32.mrf.mxu0
        %v452 = vadd.f32 %v409, %v451
        %v453 = vand.u32 %v240, 4294901760
        %454 = vmatmul.f32.gmra.mxu0 %v453
        %v455 = vpop.f32.mrf.mxu0
        %v456 = vadd.f32 %v415, %v455
        %v457 = vand.u32 %v243, 4294901760
        %458 = vmatmul.f32.gmra.mxu0 %v457
        %v459 = vpop.f32.mrf.mxu0
        %v460 = vadd.f32 %v421, %v459
        %461 = vdwg.mxu0
        %462 = vmatpush.msra.mxu0 0.0
        %463 = vmatpush.msra.mxu0 0.0
        %464 = vmatpush.msra.mxu0 0.0
        %465 = vmatpush.msra.mxu0 0.0
        %466 = vmatpush.msra.mxu0 0.0
        %467 = vmatpush.msra.mxu0 0.0
        %468 = vmatpush.msra.mxu0 0.0
        %469 = vmatpush.msra.mxu0 0.0
        %470 = vmatpush.msra.mxu0 0.0
        %471 = vmatpush.msra.mxu0 0.0
        %472 = vmatpush.msra.mxu0 0.0
        %473 = vmatpush.msra.mxu0 0.0
        %474 = vmatpush.msra.mxu0 0.0
        %475 = vmatpush.msra.mxu0 0.0
        %v476 = vand.u32 %v218, 4294901760
        %477 = vmatpush.msra.mxu0 %v476
        %v478 = vand.u32 %v216, 4294901760
        %479 = vmatpush.msra.mxu0 %v478
        %v480 = vand.u32 %v234, 4294901760
        %481 = vmatmul.f32.gmra.mxu0 %v480
        %v482 = vpop.f32.mrf.mxu0
        %v483 = vadd.f32 %v448, %v482
        %v484 = vand.u32 %v237, 4294901760
        %485 = vmatmul.f32.gmra.mxu0 %v484
        %v486 = vpop.f32.mrf.mxu0
        %v487 = vadd.f32 %v452, %v486
        %v488 = vand.u32 %v240, 4294901760
        %489 = vmatmul.f32.gmra.mxu0 %v488
        %v490 = vpop.f32.mrf.mxu0
        %v491 = vadd.f32 %v456, %v490
        %v492 = vand.u32 %v243, 4294901760
        %493 = vmatmul.f32.gmra.mxu0 %v492
        %v494 = vpop.f32.mrf.mxu0
        %v495 = vadd.f32 %v460, %v494
        %496 = vdwg.mxu0
        %497 = vmatpush.msra.mxu0 0.0
        %498 = vmatpush.msra.mxu0 0.0
        %499 = vmatpush.msra.mxu0 0.0
        %500 = vmatpush.msra.mxu0 0.0
        %501 = vmatpush.msra.mxu0 0.0
        %502 = vmatpush.msra.mxu0 0.0
        %503 = vmatpush.msra.mxu0 0.0
        %504 = vmatpush.msra.mxu0 0.0
        %505 = vmatpush.msra.mxu0 0.0
        %506 = vmatpush.msra.mxu0 0.0
        %507 = vmatpush.msra.mxu0 0.0
        %508 = vmatpush.msra.mxu0 0.0
        %509 = vmatpush.msra.mxu0 0.0
        %510 = vmatpush.msra.mxu0 0.0
        %v511 = vand.u32 %v219, 4294901760
        %512 = vmatpush.msra.mxu0 %v511
        %v513 = vand.u32 %v217, 4294901760
        %514 = vmatpush.msra.mxu0 %v513
        %v515 = vand.u32 %v234, 4294901760
        %v516 = vsub.f32 %v234, %v515
        %v517 = vand.u32 %v516, 4294901760
        %v518 = vsub.f32 %v516, %v517
        %v519 = vand.u32 %v518, 4294901760
        %520 = vmatmul.f32.gmra.mxu0 %v519
        %v521 = vpop.f32.mrf.mxu0
        %v522 = vadd.f32 0.0, %v521
        %v523 = vand.u32 %v237, 4294901760
        %v524 = vsub.f32 %v237, %v523
        %v525 = vand.u32 %v524, 4294901760
        %v526 = vsub.f32 %v524, %v525
        %v527 = vand.u32 %v526, 4294901760
        %528 = vmatmul.f32.gmra.mxu0 %v527
        %v529 = vpop.f32.mrf.mxu0
        %v530 = vadd.f32 0.0, %v529
        %v531 = vand.u32 %v240, 4294901760
        %v532 = vsub.f32 %v240, %v531
        %v533 = vand.u32 %v532, 4294901760
        %v534 = vsub.f32 %v532, %v533
        %v535 = vand.u32 %v534, 4294901760
        %536 = vmatmul.f32.gmra.mxu0 %v535
        %v537 = vpop.f32.mrf.mxu0
        %v538 = vadd.f32 0.0, %v537
        %v539 = vand.u32 %v243, 4294901760
        %v540 = vsub.f32 %v243, %v539
        %v541 = vand.u32 %v540, 4294901760
        %v542 = vsub.f32 %v540, %v541
        %v543 = vand.u32 %v542, 4294901760
        %544 = vmatmul.f32.gmra.mxu0 %v543
        %v545 = vpop.f32.mrf.mxu0
        %v546 = vadd.f32 0.0, %v545
        %547 = vdwg.mxu0
        %548 = vmatpush.msra.mxu0 0.0
        %549 = vmatpush.msra.mxu0 0.0
        %550 = vmatpush.msra.mxu0 0.0
        %551 = vmatpush.msra.mxu0 0.0
        %552 = vmatpush.msra.mxu0 0.0
        %553 = vmatpush.msra.mxu0 0.0
        %554 = vmatpush.msra.mxu0 0.0
        %555 = vmatpush.msra.mxu0 0.0
        %556 = vmatpush.msra.mxu0 0.0
        %557 = vmatpush.msra.mxu0 0.0
        %558 = vmatpush.msra.mxu0 0.0
        %559 = vmatpush.msra.mxu0 0.0
        %560 = vmatpush.msra.mxu0 0.0
        %561 = vmatpush.msra.mxu0 0.0
        %v562 = vand.u32 %v219, 4294901760
        %v563 = vsub.f32 %v219, %v562
        %v564 = vand.u32 %v563, 4294901760
        %v565 = vsub.f32 %v563, %v564
        %v566 = vand.u32 %v565, 4294901760
        %567 = vmatpush.msra.mxu0 %v566
        %v568 = vand.u32 %v217, 4294901760
        %v569 = vsub.f32 %v217, %v568
        %v570 = vand.u32 %v569, 4294901760
        %v571 = vsub.f32 %v569, %v570
        %v572 = vand.u32 %v571, 4294901760
        %573 = vmatpush.msra.mxu0 %v572
        %v574 = vand.u32 %v234, 4294901760
        %575 = vmatmul.f32.gmra.mxu0 %v574
        %v576 = vpop.f32.mrf.mxu0
        %v577 = vadd.f32 %v522, %v576
        %v578 = vand.u32 %v237, 4294901760
        %579 = vmatmul.f32.gmra.mxu0 %v578
        %v580 = vpop.f32.mrf.mxu0
        %v581 = vadd.f32 %v530, %v580
        %v582 = vand.u32 %v240, 4294901760
        %583 = vmatmul.f32.gmra.mxu0 %v582
        %v584 = vpop.f32.mrf.mxu0
        %v585 = vadd.f32 %v538, %v584
        %v586 = vand.u32 %v243, 4294901760
        %587 = vmatmul.f32.gmra.mxu0 %v586
        %v588 = vpop.f32.mrf.mxu0
        %v589 = vadd.f32 %v546, %v588
        %590 = vdwg.mxu0
        %591 = vmatpush.msra.mxu0 0.0
        %592 = vmatpush.msra.mxu0 0.0
        %593 = vmatpush.msra.mxu0 0.0
        %594 = vmatpush.msra.mxu0 0.0
        %595 = vmatpush.msra.mxu0 0.0
        %596 = vmatpush.msra.mxu0 0.0
        %597 = vmatpush.msra.mxu0 0.0
        %598 = vmatpush.msra.mxu0 0.0
        %599 = vmatpush.msra.mxu0 0.0
        %600 = vmatpush.msra.mxu0 0.0
        %601 = vmatpush.msra.mxu0 0.0
        %602 = vmatpush.msra.mxu0 0.0
        %603 = vmatpush.msra.mxu0 0.0
        %604 = vmatpush.msra.mxu0 0.0
        %v605 = vand.u32 %v219, 4294901760
        %v606 = vsub.f32 %v219, %v605
        %607 = vmatpush.msra.mxu0 %v606
        %v608 = vand.u32 %v217, 4294901760
        %v609 = vsub.f32 %v217, %v608
        %610 = vmatpush.msra.mxu0 %v609
        %v611 = vand.u32 %v234, 4294901760
        %v612 = vsub.f32 %v234, %v611
        %613 = vmatmul.f32.gmra.mxu0 %v612
        %v614 = vpop.f32.mrf.mxu0
        %v615 = vadd.f32 %v577, %v614
        %v616 = vand.u32 %v237, 4294901760
        %v617 = vsub.f32 %v237, %v616
        %618 = vmatmul.f32.gmra.mxu0 %v617
        %v619 = vpop.f32.mrf.mxu0
        %v620 = vadd.f32 %v581, %v619
        %v621 = vand.u32 %v240, 4294901760
        %v622 = vsub.f32 %v240, %v621
        %623 = vmatmul.f32.gmra.mxu0 %v622
        %v624 = vpop.f32.mrf.mxu0
        %v625 = vadd.f32 %v585, %v624
        %v626 = vand.u32 %v243, 4294901760
        %v627 = vsub.f32 %v243, %v626
        %628 = vmatmul.f32.gmra.mxu0 %v627
        %v629 = vpop.f32.mrf.mxu0
        %v630 = vadd.f32 %v589, %v629
        %631 = vdwg.mxu0
        %632 = vmatpush.msra.mxu0 0.0
        %633 = vmatpush.msra.mxu0 0.0
        %634 = vmatpush.msra.mxu0 0.0
        %635 = vmatpush.msra.mxu0 0.0
        %636 = vmatpush.msra.mxu0 0.0
        %637 = vmatpush.msra.mxu0 0.0
        %638 = vmatpush.msra.mxu0 0.0
        %639 = vmatpush.msra.mxu0 0.0
        %640 = vmatpush.msra.mxu0 0.0
        %641 = vmatpush.msra.mxu0 0.0
        %642 = vmatpush.msra.mxu0 0.0
        %643 = vmatpush.msra.mxu0 0.0
        %644 = vmatpush.msra.mxu0 0.0
        %645 = vmatpush.msra.mxu0 0.0
        %v646 = vand.u32 %v219, 4294901760
        %647 = vmatpush.msra.mxu0 %v646
        %v648 = vand.u32 %v217, 4294901760
        %649 = vmatpush.msra.mxu0 %v648
        %v650 = vand.u32 %v234, 4294901760
        %v651 = vsub.f32 %v234, %v650
        %v652 = vand.u32 %v651, 4294901760
        %653 = vmatmul.f32.gmra.mxu0 %v652
        %v654 = vpop.f32.mrf.mxu0
        %v655 = vadd.f32 %v615, %v654
        %v656 = vand.u32 %v237, 4294901760
        %v657 = vsub.f32 %v237, %v656
        %v658 = vand.u32 %v657, 4294901760
        %659 = vmatmul.f32.gmra.mxu0 %v658
        %v660 = vpop.f32.mrf.mxu0
        %v661 = vadd.f32 %v620, %v660
        %v662 = vand.u32 %v240, 4294901760
        %v663 = vsub.f32 %v240, %v662
        %v664 = vand.u32 %v663, 4294901760
        %665 = vmatmul.f32.gmra.mxu0 %v664
        %v666 = vpop.f32.mrf.mxu0
        %v667 = vadd.f32 %v625, %v666
        %v668 = vand.u32 %v243, 4294901760
        %v669 = vsub.f32 %v243, %v668
        %v670 = vand.u32 %v669, 4294901760
        %671 = vmatmul.f32.gmra.mxu0 %v670
        %v672 = vpop.f32.mrf.mxu0
        %v673 = vadd.f32 %v630, %v672
        %674 = vdwg.mxu0
        %675 = vmatpush.msra.mxu0 0.0
        %676 = vmatpush.msra.mxu0 0.0
        %677 = vmatpush.msra.mxu0 0.0
        %678 = vmatpush.msra.mxu0 0.0
        %679 = vmatpush.msra.mxu0 0.0
        %680 = vmatpush.msra.mxu0 0.0
        %681 = vmatpush.msra.mxu0 0.0
        %682 = vmatpush.msra.mxu0 0.0
        %683 = vmatpush.msra.mxu0 0.0
        %684 = vmatpush.msra.mxu0 0.0
        %685 = vmatpush.msra.mxu0 0.0
        %686 = vmatpush.msra.mxu0 0.0
        %687 = vmatpush.msra.mxu0 0.0
        %688 = vmatpush.msra.mxu0 0.0
        %v689 = vand.u32 %v219, 4294901760
        %v690 = vsub.f32 %v219, %v689
        %v691 = vand.u32 %v690, 4294901760
        %692 = vmatpush.msra.mxu0 %v691
        %v693 = vand.u32 %v217, 4294901760
        %v694 = vsub.f32 %v217, %v693
        %v695 = vand.u32 %v694, 4294901760
        %696 = vmatpush.msra.mxu0 %v695
        %v697 = vand.u32 %v234, 4294901760
        %698 = vmatmul.f32.gmra.mxu0 %v697
        %v699 = vpop.f32.mrf.mxu0
        %v700 = vadd.f32 %v655, %v699
        %v701 = vand.u32 %v237, 4294901760
        %702 = vmatmul.f32.gmra.mxu0 %v701
        %v703 = vpop.f32.mrf.mxu0
        %v704 = vadd.f32 %v661, %v703
        %v705 = vand.u32 %v240, 4294901760
        %706 = vmatmul.f32.gmra.mxu0 %v705
        %v707 = vpop.f32.mrf.mxu0
        %v708 = vadd.f32 %v667, %v707
        %v709 = vand.u32 %v243, 4294901760
        %710 = vmatmul.f32.gmra.mxu0 %v709
        %v711 = vpop.f32.mrf.mxu0
        %v712 = vadd.f32 %v673, %v711
        %713 = vdwg.mxu0
        %714 = vmatpush.msra.mxu0 0.0
        %715 = vmatpush.msra.mxu0 0.0
        %716 = vmatpush.msra.mxu0 0.0
        %717 = vmatpush.msra.mxu0 0.0
        %718 = vmatpush.msra.mxu0 0.0
        %719 = vmatpush.msra.mxu0 0.0
        %720 = vmatpush.msra.mxu0 0.0
        %721 = vmatpush.msra.mxu0 0.0
        %722 = vmatpush.msra.mxu0 0.0
        %723 = vmatpush.msra.mxu0 0.0
        %724 = vmatpush.msra.mxu0 0.0
        %725 = vmatpush.msra.mxu0 0.0
        %726 = vmatpush.msra.mxu0 0.0
        %727 = vmatpush.msra.mxu0 0.0
        %v728 = vand.u32 %v219, 4294901760
        %729 = vmatpush.msra.mxu0 %v728
        %v730 = vand.u32 %v217, 4294901760
        %731 = vmatpush.msra.mxu0 %v730
        %v732 = vand.u32 %v234, 4294901760
        %733 = vmatmul.f32.gmra.mxu0 %v732
        %v734 = vpop.f32.mrf.mxu0
        %v735 = vadd.f32 %v700, %v734
        %v736 = vand.u32 %v237, 4294901760
        %737 = vmatmul.f32.gmra.mxu0 %v736
        %v738 = vpop.f32.mrf.mxu0
        %v739 = vadd.f32 %v704, %v738
        %v740 = vand.u32 %v240, 4294901760
        %741 = vmatmul.f32.gmra.mxu0 %v740
        %v742 = vpop.f32.mrf.mxu0
        %v743 = vadd.f32 %v708, %v742
        %v744 = vand.u32 %v243, 4294901760
        %745 = vmatmul.f32.gmra.mxu0 %v744
        %v746 = vpop.f32.mrf.mxu0
        %v747 = vadd.f32 %v712, %v746
        %748 = vdwg.mxu0
        %749 = vst [vmem:[%s169] sm:$0xff] %v483
        %750 = vst [vmem:[%s169 + $0x8] sm:$0xff] %v735
        %751 = vst [vmem:[%s169 + $0x10] sm:$0xff] %v487
        %752 = vst [vmem:[%s169 + $0x18] sm:$0xff] %v739
        %753 = vst [vmem:[%s169 + $0x20] sm:$0xff] %v491
        %754 = vst [vmem:[%s169 + $0x28] sm:$0xff] %v743
        %755 = vst [vmem:[%s169 + $0x30] sm:$0xff] %v495
        %756 = vst [vmem:[%s169 + $0x38] sm:$0xff] %v747
        %v758 = vsel %vm232, %v175, 0
        %v761 = vsel %vm232, %v176, 0
        %v764 = vsel %vm232, %v177, 0
        %v767 = vsel %vm232, %v178, 0
        %769 = vmatpush.msra.mxu0 0.0
        %770 = vmatpush.msra.mxu0 0.0
        %771 = vmatpush.msra.mxu0 0.0
        %772 = vmatpush.msra.mxu0 0.0
        %773 = vmatpush.msra.mxu0 0.0
        %774 = vmatpush.msra.mxu0 0.0
        %775 = vmatpush.msra.mxu0 0.0
        %776 = vmatpush.msra.mxu0 0.0
        %777 = vmatpush.msra.mxu0 0.0
        %778 = vmatpush.msra.mxu0 0.0
        %779 = vmatpush.msra.mxu0 0.0
        %780 = vmatpush.msra.mxu0 0.0
        %781 = vmatpush.msra.mxu0 0.0
        %782 = vmatpush.msra.mxu0 0.0
        %v783 = vand.u32 %v230, 4294901760
        %784 = vmatpush.msra.mxu0 %v783
        %v785 = vand.u32 %v228, 4294901760
        %786 = vmatpush.msra.mxu0 %v785
        %v787 = vand.u32 %v758, 4294901760
        %v788 = vsub.f32 %v758, %v787
        %v789 = vand.u32 %v788, 4294901760
        %v790 = vsub.f32 %v788, %v789
        %v791 = vand.u32 %v790, 4294901760
        %792 = vmatmul.f32.gmra.mxu0 %v791
        %v793 = vpop.f32.mrf.mxu0
        %v794 = vadd.f32 0.0, %v793
        %v795 = vand.u32 %v761, 4294901760
        %v796 = vsub.f32 %v761, %v795
        %v797 = vand.u32 %v796, 4294901760
        %v798 = vsub.f32 %v796, %v797
        %v799 = vand.u32 %v798, 4294901760
        %800 = vmatmul.f32.gmra.mxu0 %v799
        %v801 = vpop.f32.mrf.mxu0
        %v802 = vadd.f32 0.0, %v801
        %v803 = vand.u32 %v764, 4294901760
        %v804 = vsub.f32 %v764, %v803
        %v805 = vand.u32 %v804, 4294901760
        %v806 = vsub.f32 %v804, %v805
        %v807 = vand.u32 %v806, 4294901760
        %808 = vmatmul.f32.gmra.mxu0 %v807
        %v809 = vpop.f32.mrf.mxu0
        %v810 = vadd.f32 0.0, %v809
        %v811 = vand.u32 %v767, 4294901760
        %v812 = vsub.f32 %v767, %v811
        %v813 = vand.u32 %v812, 4294901760
        %v814 = vsub.f32 %v812, %v813
        %v815 = vand.u32 %v814, 4294901760
        %816 = vmatmul.f32.gmra.mxu0 %v815
        %v817 = vpop.f32.mrf.mxu0
        %v818 = vadd.f32 0.0, %v817
        %819 = vdwg.mxu0
        %820 = vmatpush.msra.mxu0 0.0
        %821 = vmatpush.msra.mxu0 0.0
        %822 = vmatpush.msra.mxu0 0.0
        %823 = vmatpush.msra.mxu0 0.0
        %824 = vmatpush.msra.mxu0 0.0
        %825 = vmatpush.msra.mxu0 0.0
        %826 = vmatpush.msra.mxu0 0.0
        %827 = vmatpush.msra.mxu0 0.0
        %828 = vmatpush.msra.mxu0 0.0
        %829 = vmatpush.msra.mxu0 0.0
        %830 = vmatpush.msra.mxu0 0.0
        %831 = vmatpush.msra.mxu0 0.0
        %832 = vmatpush.msra.mxu0 0.0
        %833 = vmatpush.msra.mxu0 0.0
        %v834 = vand.u32 %v230, 4294901760
        %v835 = vsub.f32 %v230, %v834
        %v836 = vand.u32 %v835, 4294901760
        %v837 = vsub.f32 %v835, %v836
        %v838 = vand.u32 %v837, 4294901760
        %839 = vmatpush.msra.mxu0 %v838
        %v840 = vand.u32 %v228, 4294901760
        %v841 = vsub.f32 %v228, %v840
        %v842 = vand.u32 %v841, 4294901760
        %v843 = vsub.f32 %v841, %v842
        %v844 = vand.u32 %v843, 4294901760
        %845 = vmatpush.msra.mxu0 %v844
        %v846 = vand.u32 %v758, 4294901760
        %847 = vmatmul.f32.gmra.mxu0 %v846
        %v848 = vpop.f32.mrf.mxu0
        %v849 = vadd.f32 %v794, %v848
        %v850 = vand.u32 %v761, 4294901760
        %851 = vmatmul.f32.gmra.mxu0 %v850
        %v852 = vpop.f32.mrf.mxu0
        %v853 = vadd.f32 %v802, %v852
        %v854 = vand.u32 %v764, 4294901760
        %855 = vmatmul.f32.gmra.mxu0 %v854
        %v856 = vpop.f32.mrf.mxu0
        %v857 = vadd.f32 %v810, %v856
        %v858 = vand.u32 %v767, 4294901760
        %859 = vmatmul.f32.gmra.mxu0 %v858
        %v860 = vpop.f32.mrf.mxu0
        %v861 = vadd.f32 %v818, %v860
        %862 = vdwg.mxu0
        %863 = vmatpush.msra.mxu0 0.0
        %864 = vmatpush.msra.mxu0 0.0
        %865 = vmatpush.msra.mxu0 0.0
        %866 = vmatpush.msra.mxu0 0.0
        %867 = vmatpush.msra.mxu0 0.0
        %868 = vmatpush.msra.mxu0 0.0
        %869 = vmatpush.msra.mxu0 0.0
        %870 = vmatpush.msra.mxu0 0.0
        %871 = vmatpush.msra.mxu0 0.0
        %872 = vmatpush.msra.mxu0 0.0
        %873 = vmatpush.msra.mxu0 0.0
        %874 = vmatpush.msra.mxu0 0.0
        %875 = vmatpush.msra.mxu0 0.0
        %876 = vmatpush.msra.mxu0 0.0
        %v877 = vand.u32 %v230, 4294901760
        %v878 = vsub.f32 %v230, %v877
        %879 = vmatpush.msra.mxu0 %v878
        %v880 = vand.u32 %v228, 4294901760
        %v881 = vsub.f32 %v228, %v880
        %882 = vmatpush.msra.mxu0 %v881
        %v883 = vand.u32 %v758, 4294901760
        %v884 = vsub.f32 %v758, %v883
        %885 = vmatmul.f32.gmra.mxu0 %v884
        %v886 = vpop.f32.mrf.mxu0
        %v887 = vadd.f32 %v849, %v886
        %v888 = vand.u32 %v761, 4294901760
        %v889 = vsub.f32 %v761, %v888
        %890 = vmatmul.f32.gmra.mxu0 %v889
        %v891 = vpop.f32.mrf.mxu0
        %v892 = vadd.f32 %v853, %v891
        %v893 = vand.u32 %v764, 4294901760
        %v894 = vsub.f32 %v764, %v893
        %895 = vmatmul.f32.gmra.mxu0 %v894
        %v896 = vpop.f32.mrf.mxu0
        %v897 = vadd.f32 %v857, %v896
        %v898 = vand.u32 %v767, 4294901760
        %v899 = vsub.f32 %v767, %v898
        %900 = vmatmul.f32.gmra.mxu0 %v899
        %v901 = vpop.f32.mrf.mxu0
        %v902 = vadd.f32 %v861, %v901
        %903 = vdwg.mxu0
        %904 = vmatpush.msra.mxu0 0.0
        %905 = vmatpush.msra.mxu0 0.0
        %906 = vmatpush.msra.mxu0 0.0
        %907 = vmatpush.msra.mxu0 0.0
        %908 = vmatpush.msra.mxu0 0.0
        %909 = vmatpush.msra.mxu0 0.0
        %910 = vmatpush.msra.mxu0 0.0
        %911 = vmatpush.msra.mxu0 0.0
        %912 = vmatpush.msra.mxu0 0.0
        %913 = vmatpush.msra.mxu0 0.0
        %914 = vmatpush.msra.mxu0 0.0
        %915 = vmatpush.msra.mxu0 0.0
        %916 = vmatpush.msra.mxu0 0.0
        %917 = vmatpush.msra.mxu0 0.0
        %v918 = vand.u32 %v230, 4294901760
        %919 = vmatpush.msra.mxu0 %v918
        %v920 = vand.u32 %v228, 4294901760
        %921 = vmatpush.msra.mxu0 %v920
        %v922 = vand.u32 %v758, 4294901760
        %v923 = vsub.f32 %v758, %v922
        %v924 = vand.u32 %v923, 4294901760
        %925 = vmatmul.f32.gmra.mxu0 %v924
        %v926 = vpop.f32.mrf.mxu0
        %v927 = vadd.f32 %v887, %v926
        %v928 = vand.u32 %v761, 4294901760
        %v929 = vsub.f32 %v761, %v928
        %v930 = vand.u32 %v929, 4294901760
        %931 = vmatmul.f32.gmra.mxu0 %v930
        %v932 = vpop.f32.mrf.mxu0
        %v933 = vadd.f32 %v892, %v932
        %v934 = vand.u32 %v764, 4294901760
        %v935 = vsub.f32 %v764, %v934
        %v936 = vand.u32 %v935, 4294901760
        %937 = vmatmul.f32.gmra.mxu0 %v936
        %v938 = vpop.f32.mrf.mxu0
        %v939 = vadd.f32 %v897, %v938
        %v940 = vand.u32 %v767, 4294901760
        %v941 = vsub.f32 %v767, %v940
        %v942 = vand.u32 %v941, 4294901760
        %943 = vmatmul.f32.gmra.mxu0 %v942
        %v944 = vpop.f32.mrf.mxu0
        %v945 = vadd.f32 %v902, %v944
        %946 = vdwg.mxu0
        %947 = vmatpush.msra.mxu0 0.0
        %948 = vmatpush.msra.mxu0 0.0
        %949 = vmatpush.msra.mxu0 0.0
        %950 = vmatpush.msra.mxu0 0.0
        %951 = vmatpush.msra.mxu0 0.0
        %952 = vmatpush.msra.mxu0 0.0
        %953 = vmatpush.msra.mxu0 0.0
        %954 = vmatpush.msra.mxu0 0.0
        %955 = vmatpush.msra.mxu0 0.0
        %956 = vmatpush.msra.mxu0 0.0
        %957 = vmatpush.msra.mxu0 0.0
        %958 = vmatpush.msra.mxu0 0.0
        %959 = vmatpush.msra.mxu0 0.0
        %960 = vmatpush.msra.mxu0 0.0
        %v961 = vand.u32 %v230, 4294901760
        %v962 = vsub.f32 %v230, %v961
        %v963 = vand.u32 %v962, 4294901760
        %964 = vmatpush.msra.mxu0 %v963
        %v965 = vand.u32 %v228, 4294901760
        %v966 = vsub.f32 %v228, %v965
        %v967 = vand.u32 %v966, 4294901760
        %968 = vmatpush.msra.mxu0 %v967
        %v969 = vand.u32 %v758, 4294901760
        %970 = vmatmul.f32.gmra.mxu0 %v969
        %v971 = vpop.f32.mrf.mxu0
        %v972 = vadd.f32 %v927, %v971
        %v973 = vand.u32 %v761, 4294901760
        %974 = vmatmul.f32.gmra.mxu0 %v973
        %v975 = vpop.f32.mrf.mxu0
        %v976 = vadd.f32 %v933, %v975
        %v977 = vand.u32 %v764, 4294901760
        %978 = vmatmul.f32.gmra.mxu0 %v977
        %v979 = vpop.f32.mrf.mxu0
        %v980 = vadd.f32 %v939, %v979
        %v981 = vand.u32 %v767, 4294901760
        %982 = vmatmul.f32.gmra.mxu0 %v981
        %v983 = vpop.f32.mrf.mxu0
        %v984 = vadd.f32 %v945, %v983
        %985 = vdwg.mxu0
        %986 = vmatpush.msra.mxu0 0.0
        %987 = vmatpush.msra.mxu0 0.0
        %988 = vmatpush.msra.mxu0 0.0
        %989 = vmatpush.msra.mxu0 0.0
        %990 = vmatpush.msra.mxu0 0.0
        %991 = vmatpush.msra.mxu0 0.0
        %992 = vmatpush.msra.mxu0 0.0
        %993 = vmatpush.msra.mxu0 0.0
        %994 = vmatpush.msra.mxu0 0.0
        %995 = vmatpush.msra.mxu0 0.0
        %996 = vmatpush.msra.mxu0 0.0
        %997 = vmatpush.msra.mxu0 0.0
        %998 = vmatpush.msra.mxu0 0.0
        %999 = vmatpush.msra.mxu0 0.0
        %v1000 = vand.u32 %v230, 4294901760
        %1001 = vmatpush.msra.mxu0 %v1000
        %v1002 = vand.u32 %v228, 4294901760
        %1003 = vmatpush.msra.mxu0 %v1002
        %v1004 = vand.u32 %v758, 4294901760
        %1005 = vmatmul.f32.gmra.mxu0 %v1004
        %v1006 = vpop.f32.mrf.mxu0
        %v1007 = vadd.f32 %v972, %v1006
        %v1008 = vand.u32 %v761, 4294901760
        %1009 = vmatmul.f32.gmra.mxu0 %v1008
        %v1010 = vpop.f32.mrf.mxu0
        %v1011 = vadd.f32 %v976, %v1010
        %v1012 = vand.u32 %v764, 4294901760
        %1013 = vmatmul.f32.gmra.mxu0 %v1012
        %v1014 = vpop.f32.mrf.mxu0
        %v1015 = vadd.f32 %v980, %v1014
        %v1016 = vand.u32 %v767, 4294901760
        %1017 = vmatmul.f32.gmra.mxu0 %v1016
        %v1018 = vpop.f32.mrf.mxu0
        %v1019 = vadd.f32 %v984, %v1018
        %1020 = vdwg.mxu0
        %1021 = vmatpush.msra.mxu0 0.0
        %1022 = vmatpush.msra.mxu0 0.0
        %1023 = vmatpush.msra.mxu0 0.0
        %1024 = vmatpush.msra.mxu0 0.0
        %1025 = vmatpush.msra.mxu0 0.0
        %1026 = vmatpush.msra.mxu0 0.0
        %1027 = vmatpush.msra.mxu0 0.0
        %1028 = vmatpush.msra.mxu0 0.0
        %1029 = vmatpush.msra.mxu0 0.0
        %1030 = vmatpush.msra.mxu0 0.0
        %1031 = vmatpush.msra.mxu0 0.0
        %1032 = vmatpush.msra.mxu0 0.0
        %1033 = vmatpush.msra.mxu0 0.0
        %1034 = vmatpush.msra.mxu0 0.0
        %v1035 = vand.u32 %v231, 4294901760
        %1036 = vmatpush.msra.mxu0 %v1035
        %v1037 = vand.u32 %v229, 4294901760
        %1038 = vmatpush.msra.mxu0 %v1037
        %v1039 = vand.u32 %v758, 4294901760
        %v1040 = vsub.f32 %v758, %v1039
        %v1041 = vand.u32 %v1040, 4294901760
        %v1042 = vsub.f32 %v1040, %v1041
        %v1043 = vand.u32 %v1042, 4294901760
        %1044 = vmatmul.f32.gmra.mxu0 %v1043
        %v1045 = vpop.f32.mrf.mxu0
        %v1046 = vadd.f32 0.0, %v1045
        %v1047 = vand.u32 %v761, 4294901760
        %v1048 = vsub.f32 %v761, %v1047
        %v1049 = vand.u32 %v1048, 4294901760
        %v1050 = vsub.f32 %v1048, %v1049
        %v1051 = vand.u32 %v1050, 4294901760
        %1052 = vmatmul.f32.gmra.mxu0 %v1051
        %v1053 = vpop.f32.mrf.mxu0
        %v1054 = vadd.f32 0.0, %v1053
        %v1055 = vand.u32 %v764, 4294901760
        %v1056 = vsub.f32 %v764, %v1055
        %v1057 = vand.u32 %v1056, 4294901760
        %v1058 = vsub.f32 %v1056, %v1057
        %v1059 = vand.u32 %v1058, 4294901760
        %1060 = vmatmul.f32.gmra.mxu0 %v1059
        %v1061 = vpop.f32.mrf.mxu0
        %v1062 = vadd.f32 0.0, %v1061
        %v1063 = vand.u32 %v767, 4294901760
        %v1064 = vsub.f32 %v767, %v1063
        %v1065 = vand.u32 %v1064, 4294901760
        %v1066 = vsub.f32 %v1064, %v1065
        %v1067 = vand.u32 %v1066, 4294901760
        %1068 = vmatmul.f32.gmra.mxu0 %v1067
        %v1069 = vpop.f32.mrf.mxu0
        %v1070 = vadd.f32 0.0, %v1069
        %1071 = vdwg.mxu0
        %1072 = vmatpush.msra.mxu0 0.0
        %1073 = vmatpush.msra.mxu0 0.0
        %1074 = vmatpush.msra.mxu0 0.0
        %1075 = vmatpush.msra.mxu0 0.0
        %1076 = vmatpush.msra.mxu0 0.0
        %1077 = vmatpush.msra.mxu0 0.0
        %1078 = vmatpush.msra.mxu0 0.0
        %1079 = vmatpush.msra.mxu0 0.0
        %1080 = vmatpush.msra.mxu0 0.0
        %1081 = vmatpush.msra.mxu0 0.0
        %1082 = vmatpush.msra.mxu0 0.0
        %1083 = vmatpush.msra.mxu0 0.0
        %1084 = vmatpush.msra.mxu0 0.0
        %1085 = vmatpush.msra.mxu0 0.0
        %v1086 = vand.u32 %v231, 4294901760
        %v1087 = vsub.f32 %v231, %v1086
        %v1088 = vand.u32 %v1087, 4294901760
        %v1089 = vsub.f32 %v1087, %v1088
        %v1090 = vand.u32 %v1089, 4294901760
        %1091 = vmatpush.msra.mxu0 %v1090
        %v1092 = vand.u32 %v229, 4294901760
        %v1093 = vsub.f32 %v229, %v1092
        %v1094 = vand.u32 %v1093, 4294901760
        %v1095 = vsub.f32 %v1093, %v1094
        %v1096 = vand.u32 %v1095, 4294901760
        %1097 = vmatpush.msra.mxu0 %v1096
        %v1098 = vand.u32 %v758, 4294901760
        %1099 = vmatmul.f32.gmra.mxu0 %v1098
        %v1100 = vpop.f32.mrf.mxu0
        %v1101 = vadd.f32 %v1046, %v1100
        %v1102 = vand.u32 %v761, 4294901760
        %1103 = vmatmul.f32.gmra.mxu0 %v1102
        %v1104 = vpop.f32.mrf.mxu0
        %v1105 = vadd.f32 %v1054, %v1104
        %v1106 = vand.u32 %v764, 4294901760
        %1107 = vmatmul.f32.gmra.mxu0 %v1106
        %v1108 = vpop.f32.mrf.mxu0
        %v1109 = vadd.f32 %v1062, %v1108
        %v1110 = vand.u32 %v767, 4294901760
        %1111 = vmatmul.f32.gmra.mxu0 %v1110
        %v1112 = vpop.f32.mrf.mxu0
        %v1113 = vadd.f32 %v1070, %v1112
        %1114 = vdwg.mxu0
        %1115 = vmatpush.msra.mxu0 0.0
        %1116 = vmatpush.msra.mxu0 0.0
        %1117 = vmatpush.msra.mxu0 0.0
        %1118 = vmatpush.msra.mxu0 0.0
        %1119 = vmatpush.msra.mxu0 0.0
        %1120 = vmatpush.msra.mxu0 0.0
        %1121 = vmatpush.msra.mxu0 0.0
        %1122 = vmatpush.msra.mxu0 0.0
        %1123 = vmatpush.msra.mxu0 0.0
        %1124 = vmatpush.msra.mxu0 0.0
        %1125 = vmatpush.msra.mxu0 0.0
        %1126 = vmatpush.msra.mxu0 0.0
        %1127 = vmatpush.msra.mxu0 0.0
        %1128 = vmatpush.msra.mxu0 0.0
        %v1129 = vand.u32 %v231, 4294901760
        %v1130 = vsub.f32 %v231, %v1129
        %1131 = vmatpush.msra.mxu0 %v1130
        %v1132 = vand.u32 %v229, 4294901760
        %v1133 = vsub.f32 %v229, %v1132
        %1134 = vmatpush.msra.mxu0 %v1133
        %v1135 = vand.u32 %v758, 4294901760
        %v1136 = vsub.f32 %v758, %v1135
        %1137 = vmatmul.f32.gmra.mxu0 %v1136
        %v1138 = vpop.f32.mrf.mxu0
        %v1139 = vadd.f32 %v1101, %v1138
        %v1140 = vand.u32 %v761, 4294901760
        %v1141 = vsub.f32 %v761, %v1140
        %1142 = vmatmul.f32.gmra.mxu0 %v1141
        %v1143 = vpop.f32.mrf.mxu0
        %v1144 = vadd.f32 %v1105, %v1143
        %v1145 = vand.u32 %v764, 4294901760
        %v1146 = vsub.f32 %v764, %v1145
        %1147 = vmatmul.f32.gmra.mxu0 %v1146
        %v1148 = vpop.f32.mrf.mxu0
        %v1149 = vadd.f32 %v1109, %v1148
        %v1150 = vand.u32 %v767, 4294901760
        %v1151 = vsub.f32 %v767, %v1150
        %1152 = vmatmul.f32.gmra.mxu0 %v1151
        %v1153 = vpop.f32.mrf.mxu0
        %v1154 = vadd.f32 %v1113, %v1153
        %1155 = vdwg.mxu0
        %1156 = vmatpush.msra.mxu0 0.0
        %1157 = vmatpush.msra.mxu0 0.0
        %1158 = vmatpush.msra.mxu0 0.0
        %1159 = vmatpush.msra.mxu0 0.0
        %1160 = vmatpush.msra.mxu0 0.0
        %1161 = vmatpush.msra.mxu0 0.0
        %1162 = vmatpush.msra.mxu0 0.0
        %1163 = vmatpush.msra.mxu0 0.0
        %1164 = vmatpush.msra.mxu0 0.0
        %1165 = vmatpush.msra.mxu0 0.0
        %1166 = vmatpush.msra.mxu0 0.0
        %1167 = vmatpush.msra.mxu0 0.0
        %1168 = vmatpush.msra.mxu0 0.0
        %1169 = vmatpush.msra.mxu0 0.0
        %v1170 = vand.u32 %v231, 4294901760
        %1171 = vmatpush.msra.mxu0 %v1170
        %v1172 = vand.u32 %v229, 4294901760
        %1173 = vmatpush.msra.mxu0 %v1172
        %v1174 = vand.u32 %v758, 4294901760
        %v1175 = vsub.f32 %v758, %v1174
        %v1176 = vand.u32 %v1175, 4294901760
        %1177 = vmatmul.f32.gmra.mxu0 %v1176
        %v1178 = vpop.f32.mrf.mxu0
        %v1179 = vadd.f32 %v1139, %v1178
        %v1180 = vand.u32 %v761, 4294901760
        %v1181 = vsub.f32 %v761, %v1180
        %v1182 = vand.u32 %v1181, 4294901760
        %1183 = vmatmul.f32.gmra.mxu0 %v1182
        %v1184 = vpop.f32.mrf.mxu0
        %v1185 = vadd.f32 %v1144, %v1184
        %v1186 = vand.u32 %v764, 4294901760
        %v1187 = vsub.f32 %v764, %v1186
        %v1188 = vand.u32 %v1187, 4294901760
        %1189 = vmatmul.f32.gmra.mxu0 %v1188
        %v1190 = vpop.f32.mrf.mxu0
        %v1191 = vadd.f32 %v1149, %v1190
        %v1192 = vand.u32 %v767, 4294901760
        %v1193 = vsub.f32 %v767, %v1192
        %v1194 = vand.u32 %v1193, 4294901760
        %1195 = vmatmul.f32.gmra.mxu0 %v1194
        %v1196 = vpop.f32.mrf.mxu0
        %v1197 = vadd.f32 %v1154, %v1196
        %1198 = vdwg.mxu0
        %1199 = vmatpush.msra.mxu0 0.0
        %1200 = vmatpush.msra.mxu0 0.0
        %1201 = vmatpush.msra.mxu0 0.0
        %1202 = vmatpush.msra.mxu0 0.0
        %1203 = vmatpush.msra.mxu0 0.0
        %1204 = vmatpush.msra.mxu0 0.0
        %1205 = vmatpush.msra.mxu0 0.0
        %1206 = vmatpush.msra.mxu0 0.0
        %1207 = vmatpush.msra.mxu0 0.0
        %1208 = vmatpush.msra.mxu0 0.0
        %1209 = vmatpush.msra.mxu0 0.0
        %1210 = vmatpush.msra.mxu0 0.0
        %1211 = vmatpush.msra.mxu0 0.0
        %1212 = vmatpush.msra.mxu0 0.0
        %v1213 = vand.u32 %v231, 4294901760
        %v1214 = vsub.f32 %v231, %v1213
        %v1215 = vand.u32 %v1214, 4294901760
        %1216 = vmatpush.msra.mxu0 %v1215
        %v1217 = vand.u32 %v229, 4294901760
        %v1218 = vsub.f32 %v229, %v1217
        %v1219 = vand.u32 %v1218, 4294901760
        %1220 = vmatpush.msra.mxu0 %v1219
        %v1221 = vand.u32 %v758, 4294901760
        %1222 = vmatmul.f32.gmra.mxu0 %v1221
        %v1223 = vpop.f32.mrf.mxu0
        %v1224 = vadd.f32 %v1179, %v1223
        %v1225 = vand.u32 %v761, 4294901760
        %1226 = vmatmul.f32.gmra.mxu0 %v1225
        %v1227 = vpop.f32.mrf.mxu0
        %v1228 = vadd.f32 %v1185, %v1227
        %v1229 = vand.u32 %v764, 4294901760
        %1230 = vmatmul.f32.gmra.mxu0 %v1229
        %v1231 = vpop.f32.mrf.mxu0
        %v1232 = vadd.f32 %v1191, %v1231
        %v1233 = vand.u32 %v767, 4294901760
        %1234 = vmatmul.f32.gmra.mxu0 %v1233
        %v1235 = vpop.f32.mrf.mxu0
        %v1236 = vadd.f32 %v1197, %v1235
        %1237 = vdwg.mxu0
        %1238 = vmatpush.msra.mxu0 0.0
        %1239 = vmatpush.msra.mxu0 0.0
        %1240 = vmatpush.msra.mxu0 0.0
        %1241 = vmatpush.msra.mxu0 0.0
        %1242 = vmatpush.msra.mxu0 0.0
        %1243 = vmatpush.msra.mxu0 0.0
        %1244 = vmatpush.msra.mxu0 0.0
        %1245 = vmatpush.msra.mxu0 0.0
        %1246 = vmatpush.msra.mxu0 0.0
        %1247 = vmatpush.msra.mxu0 0.0
        %1248 = vmatpush.msra.mxu0 0.0
        %1249 = vmatpush.msra.mxu0 0.0
        %1250 = vmatpush.msra.mxu0 0.0
        %1251 = vmatpush.msra.mxu0 0.0
        %v1252 = vand.u32 %v231, 4294901760
        %1253 = vmatpush.msra.mxu0 %v1252
        %v1254 = vand.u32 %v229, 4294901760
        %1255 = vmatpush.msra.mxu0 %v1254
        %v1256 = vand.u32 %v758, 4294901760
        %1257 = vmatmul.f32.gmra.mxu0 %v1256
        %v1258 = vpop.f32.mrf.mxu0
        %v1259 = vadd.f32 %v1224, %v1258
        %v1260 = vand.u32 %v761, 4294901760
        %1261 = vmatmul.f32.gmra.mxu0 %v1260
        %v1262 = vpop.f32.mrf.mxu0
        %v1263 = vadd.f32 %v1228, %v1262
        %v1264 = vand.u32 %v764, 4294901760
        %1265 = vmatmul.f32.gmra.mxu0 %v1264
        %v1266 = vpop.f32.mrf.mxu0
        %v1267 = vadd.f32 %v1232, %v1266
        %v1268 = vand.u32 %v767, 4294901760
        %1269 = vmatmul.f32.gmra.mxu0 %v1268
        %v1270 = vpop.f32.mrf.mxu0
        %v1271 = vadd.f32 %v1236, %v1270
        %1272 = vdwg.mxu0
        %1273 = vst [vmem:[%s169 + $0x40] sm:$0xff] %v1007
        %1274 = vst [vmem:[%s169 + $0x48] sm:$0xff] %v1259
        %1275 = vst [vmem:[%s169 + $0x50] sm:$0xff] %v1011
        %1276 = vst [vmem:[%s169 + $0x58] sm:$0xff] %v1263
        %1277 = vst [vmem:[%s169 + $0x60] sm:$0xff] %v1015
        %1278 = vst [vmem:[%s169 + $0x68] sm:$0xff] %v1267
        %1279 = vst [vmem:[%s169 + $0x70] sm:$0xff] %v1019
        %1280 = vst [vmem:[%s169 + $0x78] sm:$0xff] %v1271
        %s1281 = sand.u32 %s82, 1
        %s1282 = scalar_lea.sflag [#allocation4], %s1281
        %s1283 = sand.u32 %s82, 1
        %s1284 = smul.addr %s1283, 128
        %s1285 = scalar_lea.vmem [#allocation7], %s1284
        // Predicated region
        $region37: #{tpu_custom_call.1} parent=27 // pred_check
          %p1286 = pneg %p92
        $region38: #{tpu_custom_call.1} parent=27 // pred_check_branch
          %1288 = sbr.rel (%p1286) target = $region40
        $region39: #{tpu_custom_call.1} parent=27 // pred_region
          %s1289 = smul.u32 2, %s23
          %1291 = vsyncadd %s1282, 0
          %s1292 = smul.addr %s22, 16
          %s1293 = sadd.s32 %s1289, %s1292
          %s1294 = smul.addr %s1293, 8
          %s1295 = scalar_lea.hbm %s2, %s1294
          %s1296 = sshll.u32 %s1285, 4
          %s1297 = int_to_ptr.vmem [resolvable:$true] %s1296
          %s1298 = sshll.u32 %s1295, 4
          %s1299 = int_to_ptr.hbm [resolvable:$true] %s1298
          %1304 = dma.vmem_to_hbm [thread:$0]  %s1297, 2048, %s1299, %s1282, 256, 256, 16
        $region40: #{tpu_custom_call.1} parent=27 // pred_fallthru
          _
      $region28: #{tpu_custom_call.1} parent=5 // pred_fallthru
        _
      %p1305 = scmp.le.s32.totalorder 2, %s13
      // Predicated region
      $region41: #{tpu_custom_call.1} parent=5 // pred_check
        %p1306 = pneg %p1305
      $region42: #{tpu_custom_call.1} parent=5 // pred_check_branch
        %1308 = sbr.rel (%p1306) target = $region44
      $region43: #{tpu_custom_call.1} parent=5 // pred_region
        %s1309 = ssub.s32 %s13, 2
        // Predicated region
        $region45: #{tpu_custom_call.1} parent=43 // pred_check
          %p1310 = pneg %p98
        $region46: #{tpu_custom_call.1} parent=43 // pred_check_branch
          %1312 = sbr.rel (%p1310) target = $region48
        $region47: #{tpu_custom_call.1} parent=43 // pred_region
          %s1313 = sand.u32 %s83, 1
          %s1314 = scalar_lea.sflag [#allocation4], %s1313
          %s1315 = sand.u32 %s83, 1
          %s1316 = smul.addr %s1315, 128
          %s1317 = scalar_lea.vmem [#allocation7], %s1316
          %1319 = dma.done %s1314, 2048
        $region48: #{tpu_custom_call.1} parent=43 // pred_fallthru
          _
      $region44: #{tpu_custom_call.1} parent=5 // pred_fallthru
        _
    $region6: #{tpu_custom_call.1} parent=1 // loop_footer
      %s17 = sadd.s32 1, %s13
    $region7: #{tpu_custom_call.1} parent=1 // loop_footer_branch
      %12 = sbr.rel target = $region3
    $region8: #{tpu_custom_call.1} parent=1 // loop_exit
      _
    %1320 = vsyncpa [#allocation3], 1
    %s1321 = scalar_lea.sflag [#allocation3], 1
    %1322 = vsyncpa %s1321, 1
    %1323 = vsyncpa [#allocation6], 1
    %1324 = vsyncpa [#allocation4], 1
    %s1325 = scalar_lea.sflag [#allocation4], 1
    %1326 = vsyncpa %s1325, 1

</llo_original>
